<compile_context>
chip_gen: v7x
topology: tpu7x:2x2x1
jax: 0.10.0
libtpu: 0.0.40
codegen_flags: <defaults>
</compile_context>

<pallas_src>
import jax
import jax.numpy as jnp
from jax.experimental import pallas as pl
from jax.experimental.pallas import tpu as pltpu


# ---------------------------------------------------------------------------
# Kernel
# ---------------------------------------------------------------------------
def ndecoder_kernel(z_ref, w2_ref, bias2_ref, w1_ref, bias1_ref, out_ref):
    # ---- layer 2: h = tanh(z @ W2^T + (L2.bias + b2.weight)) ----
    h = jnp.dot(z_ref[...], w2_ref[...], preferred_element_type=jnp.float32)
    h = jnp.tanh(h + bias2_ref[...])           # single broadcast add per tile
    # ---- layer 1: mu = tanh(h @ W1^T + (L1.bias + b1.weight)) ----
    mu = jnp.dot(h, w1_ref[...], preferred_element_type=jnp.float32)
    out_ref[...] = jnp.tanh(mu + bias1_ref[...]).astype(out_ref.dtype)


# ---------------------------------------------------------------------------
# Helpers
# ---------------------------------------------------------------------------
def _round_up(x, m):
    return ((x + m - 1) // m) * m


def _choose_tm(M, D, Hp, SLp, budget_bytes=20 * 1024 * 1024):
    """Largest row tile (multiple of 8, <=512) that fits a conservative VMEM
    budget: resident weights (x2 for buffering slack) + double-buffered z/out
    tiles + the f32 h intermediate.  Budget chosen to be safe on v7x (64 MiB
    physical / ~32 MiB scoped VMEM per TensorCore)."""
    weight_bytes = 4 * (D * Hp + Hp + Hp * SLp + SLp)
    per_row = 4 * (2 * D + 2 * SLp + Hp)
    avail = max(budget_bytes - 2 * weight_bytes, per_row * 8)
    tm = (avail // per_row // 8) * 8
    tm = max(8, min(512, tm))
    return min(tm, _round_up(M, 8))


# ---------------------------------------------------------------------------
# Wrapper
# ---------------------------------------------------------------------------
def ndecoder_forward(z, kernel_params, *, tm=None):
    """z: (B, S, input_dim) float32.  Returns mu_img: (B, S, s_len)."""
    w2t, bias2, w1t, bias1, s_len = kernel_params
    B, S, D = z.shape
    Hp = w2t.shape[1]          # padded h_node  (multiple of 128)
    SLp = w1t.shape[1]         # padded s_len   (multiple of 128)
    M = B * S

    z2d = z.reshape(M, D).astype(jnp.float32)

    if tm is None:
        tm = _choose_tm(M, D, Hp, SLp)
    m_pad = _round_up(M, tm)
    if m_pad != M:
        z2d = jnp.pad(z2d, ((0, m_pad - M), (0, 0)))
    grid = (m_pad // tm,)

    cost = pl.CostEstimate(
        flops=2 * m_pad * (D * Hp + Hp * SLp),
        transcendentals=m_pad * (Hp + SLp),
        bytes_accessed=4 * (m_pad * D + D * Hp + Hp + Hp * SLp + SLp + m_pad * SLp),
    )

    out2d = pl.pallas_call(
        ndecoder_kernel,
        out_shape=jax.ShapeDtypeStruct((m_pad, SLp), jnp.float32),
        grid=grid,
        in_specs=[
            pl.BlockSpec((tm, D), lambda i: (i, 0)),      # z rows: tiled over grid
            pl.BlockSpec((D, Hp), lambda i: (0, 0)),      # W2^T: resident
            pl.BlockSpec((1, Hp), lambda i: (0, 0)),      # L2.bias + b2.weight
            pl.BlockSpec((Hp, SLp), lambda i: (0, 0)),    # W1^T: resident
            pl.BlockSpec((1, SLp), lambda i: (0, 0)),     # L1.bias + b1.weight
        ],
        out_specs=pl.BlockSpec((tm, SLp), lambda i: (i, 0)),
        compiler_params=pltpu.CompilerParams(
            dimension_semantics=("parallel",),            # megacore on v7x
            vmem_limit_bytes=32 * 1024 * 1024,            # raise v5e 16 MiB default
        ),
        cost_estimate=cost,
    )(z2d, w2t, bias2, w1t, bias1)

    return out2d[:M, :s_len].reshape(B, S, s_len)


# ---------------------------------------------------------------------------
# Parameter init (mirrors the PyTorch module __init__) + kernel-side packing
# ---------------------------------------------------------------------------
def init_params(key, input_dim, h_node, s_len):
    k1, k2, k3, k4 = jax.random.split(key, 4)

    # xavier_normal_ for L2.weight (h_node, input_dim) and L1.weight (s_len, h_node)
    std2 = (2.0 / (input_dim + h_node)) ** 0.5
    std1 = (2.0 / (h_node + s_len)) ** 0.5
    L2_w = std2 * jax.random.normal(k1, (h_node, input_dim), jnp.float32)
    L1_w = std1 * jax.random.normal(k2, (s_len, h_node), jnp.float32)
    # nn.Linear default bias init: U(-1/sqrt(fan_in), 1/sqrt(fan_in))
    L2_b = jax.random.uniform(k3, (h_node,), jnp.float32,
                              -1.0 / (input_dim ** 0.5), 1.0 / (input_dim ** 0.5))
    L1_b = jax.random.uniform(k4, (s_len,), jnp.float32,
                              -1.0 / (h_node ** 0.5), 1.0 / (h_node ** 0.5))
    # b1 / b2 weights filled with 0 in the module
    b2_w = jnp.zeros((1, h_node), jnp.float32)
    b1_w = jnp.zeros((1, s_len), jnp.float32)

    raw = dict(L2_w=L2_w, L2_b=L2_b, b2_w=b2_w, L1_w=L1_w, L1_b=L1_b, b1_w=b1_w)

    # --- kernel-side packing: transpose, fold the two bias terms per layer,
    #     and zero-pad h_node / s_len to 128-lane multiples -----------------
    Hp = _round_up(h_node, 128)
    SLp = _round_up(s_len, 128)

    w2t = jnp.zeros((input_dim, Hp), jnp.float32).at[:, :h_node].set(L2_w.T)
    bias2 = jnp.zeros((1, Hp), jnp.float32).at[:, :h_node].set(L2_b[None, :] + b2_w)
    w1t = jnp.zeros((Hp, SLp), jnp.float32).at[:h_node, :s_len].set(L1_w.T)
    bias1 = jnp.zeros((1, SLp), jnp.float32).at[:, :s_len].set(L1_b[None, :] + b1_w)

    kernel_params = (w2t, bias2, w1t, bias1, s_len)
    return kernel_params, raw


def ndecoder_ref(z, raw):
    """Pure-JAX reference with the ORIGINAL (unpadded) module parameters."""
    h = jnp.tanh(z @ raw["L2_w"].T + raw["L2_b"] + raw["b2_w"])
    return jnp.tanh(h @ raw["L1_w"].T + raw["L1_b"] + raw["b1_w"])


# ---------------------------------------------------------------------------
if __name__ == "__main__":
    # Small shapes consistent with the module's forward:
    #   z: (batch, seq, input_dim), h_node hidden, s_len output width.
    B, S, input_dim, h_node, s_len = 2, 8, 16, 32, 16

    key = jax.random.PRNGKey(0)
    kz, kp = jax.random.split(key)
    z = jax.random.normal(kz, (B, S, input_dim), jnp.float32)
    kernel_params, raw = init_params(kp, input_dim, h_node, s_len)

    out = ndecoder_forward(z, kernel_params)
    out = jax.block_until_ready(out)

    ref = ndecoder_ref(z, raw)
    assert out.shape == (B, S, s_len)
    assert jnp.allclose(out, ref, atol=1e-5, rtol=1e-5)

    print("KERNEL_OK")
</pallas_src>

<mosaic_0001>
module attributes {stable_mosaic.version = 11 : i64} {
  func.func @ndecoder_kernel(%arg0: i32, %arg1: memref<16x16xf32, #tpu.memory_space<vmem>>, %arg2: memref<16x128xf32, #tpu.memory_space<vmem>>, %arg3: memref<1x128xf32, #tpu.memory_space<vmem>>, %arg4: memref<128x128xf32, #tpu.memory_space<vmem>>, %arg5: memref<1x128xf32, #tpu.memory_space<vmem>>, %arg6: memref<16x128xf32, #tpu.memory_space<vmem>>) attributes {dimension_semantics = [#tpu.dimension_semantics<parallel>], iteration_bounds = array<i64: 1>, scalar_prefetch = 0 : i64, scratch_operands = 0 : i64, tpu.core_type = #tpu.core_type<tc>, window_params = [{transform_indices = @transform_0, window_bounds = array<i64: 16, 16>}, {pipeline_mode = #tpu.pipeline_mode<synchronous>, transform_indices = @transform_1, window_bounds = array<i64: 16, 128>}, {pipeline_mode = #tpu.pipeline_mode<synchronous>, transform_indices = @transform_2, window_bounds = array<i64: 1, 128>}, {pipeline_mode = #tpu.pipeline_mode<synchronous>, transform_indices = @transform_3, window_bounds = array<i64: 128, 128>}, {pipeline_mode = #tpu.pipeline_mode<synchronous>, transform_indices = @transform_4, window_bounds = array<i64: 1, 128>}, {transform_indices = @transform_5, window_bounds = array<i64: 16, 128>}]} {
    %c0 = arith.constant 0 : index
    %c0_0 = arith.constant 0 : index
    %0 = vector.load %arg1[%c0, %c0_0] : memref<16x16xf32, #tpu.memory_space<vmem>>, vector<16x16xf32>
    %c0_1 = arith.constant 0 : index
    %c0_2 = arith.constant 0 : index
    %1 = vector.load %arg2[%c0_1, %c0_2] : memref<16x128xf32, #tpu.memory_space<vmem>>, vector<16x128xf32>
    %cst = arith.constant dense<0.000000e+00> : vector<16x128xf32>
    %2 = tpu.matmul %0, %1, %cst {dimension_numbers = #tpu.dot_dimension_numbers<[1], [0], [0], [1], [0, 0, 1, 1], [], []>} : vector<16x16xf32>, vector<16x128xf32>, vector<16x128xf32> -> vector<16x128xf32>
    %c0_3 = arith.constant 0 : index
    %c0_4 = arith.constant 0 : index
    %3 = vector.load %arg3[%c0_3, %c0_4] : memref<1x128xf32, #tpu.memory_space<vmem>>, vector<1x128xf32>
    %4 = vector.broadcast %3 : vector<1x128xf32> to vector<16x128xf32>
    %5 = arith.addf %2, %4 : vector<16x128xf32>
    %6 = math.tanh %5 : vector<16x128xf32>
    %c0_5 = arith.constant 0 : index
    %c0_6 = arith.constant 0 : index
    %7 = vector.load %arg4[%c0_5, %c0_6] : memref<128x128xf32, #tpu.memory_space<vmem>>, vector<128x128xf32>
    %cst_7 = arith.constant dense<0.000000e+00> : vector<16x128xf32>
    %8 = tpu.matmul %6, %7, %cst_7 {dimension_numbers = #tpu.dot_dimension_numbers<[1], [0], [0], [1], [0, 0, 1, 1], [], []>} : vector<16x128xf32>, vector<128x128xf32>, vector<16x128xf32> -> vector<16x128xf32>
    %c0_8 = arith.constant 0 : index
    %c0_9 = arith.constant 0 : index
    %9 = vector.load %arg5[%c0_8, %c0_9] : memref<1x128xf32, #tpu.memory_space<vmem>>, vector<1x128xf32>
    %10 = vector.broadcast %9 : vector<1x128xf32> to vector<16x128xf32>
    %11 = arith.addf %8, %10 : vector<16x128xf32>
    %12 = math.tanh %11 : vector<16x128xf32>
    %c0_10 = arith.constant 0 : index
    %c0_11 = arith.constant 0 : index
    %13 = vector.load %arg6[%c0_10, %c0_11] : memref<16x128xf32, #tpu.memory_space<vmem>>, vector<16x128xf32>
    tpu.vector_store %arg6[%c0_10, %c0_11], %12 {strides = array<i32>} : memref<16x128xf32, #tpu.memory_space<vmem>>, vector<16x128xf32>,
    return
  }
  func.func @transform_0(%arg0: i32) -> (i32, i32) {
    %c0_i32 = arith.constant 0 : i32
    %c0_i32_0 = arith.constant 0 : i32
    return %arg0, %c0_i32 : i32, i32
  }
  func.func @transform_1(%arg0: i32) -> (i32, i32) {
    %c0_i32 = arith.constant 0 : i32
    %c0_i32_0 = arith.constant 0 : i32
    %c0_i32_1 = arith.constant 0 : i32
    return %c0_i32, %c0_i32_0 : i32, i32
  }
  func.func @transform_2(%arg0: i32) -> (i32, i32) {
    %c0_i32 = arith.constant 0 : i32
    %c0_i32_0 = arith.constant 0 : i32
    %c0_i32_1 = arith.constant 0 : i32
    return %c0_i32, %c0_i32_0 : i32, i32
  }
  func.func @transform_3(%arg0: i32) -> (i32, i32) {
    %c0_i32 = arith.constant 0 : i32
    %c0_i32_0 = arith.constant 0 : i32
    %c0_i32_1 = arith.constant 0 : i32
    return %c0_i32, %c0_i32_0 : i32, i32
  }
  func.func @transform_4(%arg0: i32) -> (i32, i32) {
    %c0_i32 = arith.constant 0 : i32
    %c0_i32_0 = arith.constant 0 : i32
    %c0_i32_1 = arith.constant 0 : i32
    return %c0_i32, %c0_i32_0 : i32, i32
  }
  func.func @transform_5(%arg0: i32) -> (i32, i32) {
    %c0_i32 = arith.constant 0 : i32
    %c0_i32_0 = arith.constant 0 : i32
    return %arg0, %c0_i32 : i32, i32
  }
}

</mosaic_0001>

<llo_original>
// kernel: tpu_custom_call.1
$region0: #{tpu_custom_call.1}
  #allocation0 [shape = 'u32[]', space=smem, size = 0x4, offset = 0x4, fixed_abs, tag = 'smem constant byte address 0x4 - core index']
  #allocation1 [shape = 'u32[144,128]{1,0:T(1,128)}', space=vmem, size = 0x12000, scoped, tag = 'internal scratch']
  %s0 = inlined_call_operand.hbm [shape: f32[16,16], index: 0, kind: input, shape index: {}]
  %s1 = inlined_call_operand.hbm [shape: f32[16,128], index: 1, kind: input, shape index: {}]
  %s2 = inlined_call_operand.vmem [shape: f32[1,128], index: 2, kind: input, shape index: {}]
  %s3 = inlined_call_operand.hbm [shape: f32[128,128], index: 3, kind: input, shape index: {}]
  %s4 = inlined_call_operand.vmem [shape: f32[1,128], index: 4, kind: input, shape index: {}]
  %s5 = inlined_call_operand.hbm [shape: f32[16,128], index: 5, kind: output, shape index: {}]
  %s6 = sld [smem:[#allocation0]]
  $region42: #{tpu_custom_call.1} parent=0
    _
  %s8 = ssub.s32 1, %s6
  %s9 = scalar_select 0, %s8, %s6
  $region1: #{tpu_custom_call.1} parent=0
    #allocation2 [shape = 'u8[8192]{0}', space=vmem, size = 0x2000, scoped, tag = 'input window, operand 0, single buffered']
    #allocation3 [shape = 's32[1]{0}', space=sflag, size = 0x4, scoped, tag = 'scoped memory for tpu_custom_call.1']
    #allocation4 [shape = 's32[1]{0}', space=sflag, size = 0x4, scoped, tag = 'scoped memory for tpu_custom_call.1']
    #allocation5 [shape = 'u8[8192]{0}', space=vmem, size = 0x2000, scoped, tag = 'input window, operand 1, single buffered']
    #allocation6 [shape = 's32[1]{0}', space=sflag, size = 0x4, scoped, tag = 'scoped memory for tpu_custom_call.1']
    #allocation7 [shape = 'u8[65536]{0}', space=vmem, size = 0x10000, scoped, tag = 'input window, operand 3, single buffered']
    #allocation8 [shape = 'u8[8192]{0}', space=vmem, size = 0x2000, scoped, tag = 'output window, operand 0, single buffered']
    %10 = vsyncpa [#allocation3], 0
    %11 = vsyncpa [#allocation6], 0
    %12 = vsyncpa [#allocation4], 0
    // Predicated region
    $region2: #{tpu_custom_call.1} parent=1 // pred_check
      _
    $region3: #{tpu_custom_call.1} parent=1 // pred_check_branch
      %14 = sbr.rel (0) target = $region5
    $region4: #{tpu_custom_call.1} parent=1 // pred_region
      %s16 = ssub.s32 256, 256
      %17 = vsyncadd [#allocation3], %s16
      %s18 = sshll.u32 [#allocation2], 4
      %s19 = int_to_ptr.vmem [resolvable:$true] %s18
      %24 = dma.hbm_to_vmem [thread:$0]  %s0, 256, %s19, [#allocation3], 128, 128, 8
    $region5: #{tpu_custom_call.1} parent=1 // pred_fallthru
      _
    // Predicated region
    $region6: #{tpu_custom_call.1} parent=1 // pred_check
      _
    $region7: #{tpu_custom_call.1} parent=1 // pred_check_branch
      %26 = sbr.rel (0) target = $region9
    $region8: #{tpu_custom_call.1} parent=1 // pred_region
      %s28 = ssub.s32 256, 256
      %29 = vsyncadd [#allocation6], %s28
      %s30 = sshll.u32 [#allocation5], 4
      %s31 = int_to_ptr.vmem [resolvable:$true] %s30
      %36 = dma.hbm_to_vmem [thread:$0]  %s1, 256, %s31, [#allocation6], 128, 128, 8
    $region9: #{tpu_custom_call.1} parent=1 // pred_fallthru
      _
    // Predicated region
    $region10: #{tpu_custom_call.1} parent=1 // pred_check
      _
    $region11: #{tpu_custom_call.1} parent=1 // pred_check_branch
      %38 = sbr.rel (0) target = $region13
    $region12: #{tpu_custom_call.1} parent=1 // pred_region
      _
    $region13: #{tpu_custom_call.1} parent=1 // pred_fallthru
      _
    // Predicated region
    $region14: #{tpu_custom_call.1} parent=1 // pred_check
      _
    $region15: #{tpu_custom_call.1} parent=1 // pred_check_branch
      %40 = sbr.rel (0) target = $region17
    $region16: #{tpu_custom_call.1} parent=1 // pred_region
      %s42 = ssub.s32 2048, 2048
      %43 = vsyncadd [#allocation6], %s42
      %s44 = sshll.u32 [#allocation7], 4
      %s45 = int_to_ptr.vmem [resolvable:$true] %s44
      %50 = dma.hbm_to_vmem [thread:$0]  %s3, 2048, %s45, [#allocation6], 128, 128, 8
    $region17: #{tpu_custom_call.1} parent=1 // pred_fallthru
      _
    // Predicated region
    $region18: #{tpu_custom_call.1} parent=1 // pred_check
      _
    $region19: #{tpu_custom_call.1} parent=1 // pred_check_branch
      %52 = sbr.rel (0) target = $region21
    $region20: #{tpu_custom_call.1} parent=1 // pred_region
      _
    $region21: #{tpu_custom_call.1} parent=1 // pred_fallthru
      _
    // Predicated region
    $region22: #{tpu_custom_call.1} parent=1 // pred_check
      _
    $region23: #{tpu_custom_call.1} parent=1 // pred_check_branch
      %54 = sbr.rel (0) target = $region25
    $region24: #{tpu_custom_call.1} parent=1 // pred_region
      %55 = dma.done [#allocation3], 256
    $region25: #{tpu_custom_call.1} parent=1 // pred_fallthru
      _
    // Predicated region
    $region26: #{tpu_custom_call.1} parent=1 // pred_check
      _
    $region27: #{tpu_custom_call.1} parent=1 // pred_check_branch
      %57 = sbr.rel (0) target = $region29
    $region28: #{tpu_custom_call.1} parent=1 // pred_region
      %58 = dma.done [#allocation6], 256
    $region29: #{tpu_custom_call.1} parent=1 // pred_fallthru
      _
    // Predicated region
    $region30: #{tpu_custom_call.1} parent=1 // pred_check
      _
    $region31: #{tpu_custom_call.1} parent=1 // pred_check_branch
      %60 = sbr.rel (0) target = $region33
    $region32: #{tpu_custom_call.1} parent=1 // pred_region
      %61 = dma.done [#allocation6], 2048
    $region33: #{tpu_custom_call.1} parent=1 // pred_fallthru
      _
    %v62 = vld [vmem:[#allocation2] sm:$0xff]
    %v63 = vld [vmem:[#allocation2 + $0x8] sm:$0xff]
    %v64 = vld [vmem:[#allocation5] sm:$0xff]
    %v65 = vld [vmem:[#allocation5 + $0x8] sm:$0xff]
    %v66 = vld [vmem:[%s2] sm:$0x1]
    %v68 = vlaneseq
    %v69 = vshrl.u32 %v68, 7
    %v70 = vsub.s32 0, %v69
    %v71 = vrot.slane %v66, %v70
    %vm73 = vcmask 130048
    %v75 = vsel %vm73, %v62, 0
    %v78 = vsel %vm73, %v63, 0
    %80 = vmatprep.subr.mxu0 0.0
    %81 = vmatpush1.msra.mxu0 %v64
    %82 = vmatprep.subr.mxu0 0.0
    %83 = vmatpush1.msra.mxu0 %v65
    %84 = vmatprep.subr.mxu0 0.0
    %85 = vmatpush1.msra.mxu0 0.0
    %86 = vmatprep.subr.mxu0 0.0
    %87 = vmatpush1.msra.mxu0 0.0
    %88 = vmatprep.subr.mxu0 0.0
    %89 = vmatpush1.msra.mxu0 0.0
    %90 = vmatprep.subr.mxu0 0.0
    %91 = vmatpush1.msra.mxu0 0.0
    %92 = vmatprep.subr.mxu0 0.0
    %93 = vmatpush1.msra.mxu0 0.0
    %94 = vmatprep.subr.mxu0 0.0
    %95 = vmatpush1.msra.mxu0 0.0
    %96 = vmatprep.subr.mxu0 0.0
    %97 = vmatpush1.msra.mxu0 0.0
    %98 = vmatprep.subr.mxu0 0.0
    %99 = vmatpush1.msra.mxu0 0.0
    %100 = vmatprep.subr.mxu0 0.0
    %101 = vmatpush1.msra.mxu0 0.0
    %102 = vmatprep.subr.mxu0 0.0
    %103 = vmatpush1.msra.mxu0 0.0
    %104 = vmatprep.subr.mxu0 0.0
    %105 = vmatpush1.msra.mxu0 0.0
    %106 = vmatprep.subr.mxu0 0.0
    %107 = vmatpush1.msra.mxu0 0.0
    %108 = vmatprep.subr.mxu0 0.0
    %109 = vmatpush1.msra.mxu0 0.0
    %110 = vmatprep.subr.mxu0 0.0
    %111 = vmatpush1.msra.mxu0 0.0
    %112 = vmatprep.subr.mxu0 0.0
    %113 = vmatpush1.msra.mxu0 0.0
    %114 = vmatprep.subr.mxu0 0.0
    %115 = vmatpush1.msra.mxu0 0.0
    %116 = vmatprep.subr.mxu0 0.0
    %117 = vmatpush1.msra.mxu0 0.0
    %118 = vmatprep.subr.mxu0 0.0
    %119 = vmatpush1.msra.mxu0 0.0
    %120 = vmatprep.subr.mxu0 0.0
    %121 = vmatpush1.msra.mxu0 0.0
    %122 = vmatprep.subr.mxu0 0.0
    %123 = vmatpush1.msra.mxu0 0.0
    %124 = vmatprep.subr.mxu0 0.0
    %125 = vmatpush1.msra.mxu0 0.0
    %126 = vmatprep.subr.mxu0 0.0
    %127 = vmatpush1.msra.mxu0 0.0
    %128 = vmatprep.subr.mxu0 0.0
    %129 = vmatpush1.msra.mxu0 0.0
    %130 = vmatprep.subr.mxu0 0.0
    %131 = vmatpush1.msra.mxu0 0.0
    %132 = vmatprep.subr.mxu0 0.0
    %133 = vmatpush1.msra.mxu0 0.0
    %134 = vmatprep.subr.mxu0 0.0
    %135 = vmatpush1.msra.mxu0 0.0
    %136 = vmatprep.subr.mxu0 0.0
    %137 = vmatpush1.msra.mxu0 0.0
    %138 = vmatprep.subr.mxu0 0.0
    %139 = vmatpush1.msra.mxu0 0.0
    %140 = vmatprep.subr.mxu0 0.0
    %141 = vmatpush1.msra.mxu0 0.0
    %142 = vmatprep.subr.mxu0 0.0
    %143 = vmatpush1.msra.mxu0 0.0
    %144 = vmatprep.mubr.f32.mxu0 0.0
    %145 = vmatmul.mubr.f32.gmra.mrb[0].mxu0 %v75
    %v146 = vpop.f32.mrb[0].mxu0
    %v147 = vadd.f32 %v71, %v146
    %v148 = vpop.f32.mrb[0].mxu0
    %149 = vmatprep.mubr.f32.mxu0 0.0
    %150 = vmatmul.mubr.f32.gmra.mrb[0].mxu0 %v78
    %v151 = vpop.f32.mrb[0].mxu0
    %v152 = vadd.f32 %v71, %v151
    %v153 = vpop.f32.mrb[0].mxu0
    %154 = vdwg.mxu0
    %v155 = vtanh.pop %v147
    %v156 = vtanh.pop %v152
    %v157 = vld [vmem:[#allocation7] sm:$0xff]
    %v158 = vld [vmem:[#allocation7 + $0x8] sm:$0xff]
    %v159 = vld [vmem:[#allocation7 + $0x10] sm:$0xff]
    %v160 = vld [vmem:[#allocation7 + $0x18] sm:$0xff]
    %v161 = vld [vmem:[#allocation7 + $0x20] sm:$0xff]
    %v162 = vld [vmem:[#allocation7 + $0x28] sm:$0xff]
    %v163 = vld [vmem:[#allocation7 + $0x30] sm:$0xff]
    %v164 = vld [vmem:[#allocation7 + $0x38] sm:$0xff]
    %v165 = vld [vmem:[#allocation7 + $0x40] sm:$0xff]
    %v166 = vld [vmem:[#allocation7 + $0x48] sm:$0xff]
    %v167 = vld [vmem:[#allocation7 + $0x50] sm:$0xff]
    %v168 = vld [vmem:[#allocation7 + $0x58] sm:$0xff]
    %v169 = vld [vmem:[#allocation7 + $0x60] sm:$0xff]
    %v170 = vld [vmem:[#allocation7 + $0x68] sm:$0xff]
    %v171 = vld [vmem:[#allocation7 + $0x70] sm:$0xff]
    %v172 = vld [vmem:[#allocation7 + $0x78] sm:$0xff]
    %v173 = vld [vmem:[%s4] sm:$0x1]
    %v175 = vlaneseq
    %v176 = vshrl.u32 %v175, 7
    %v177 = vsub.s32 0, %v176
    %v178 = vrot.slane %v173, %v177
    %180 = vmatprep.subr.mxu0 0.0
    %181 = vmatpush1.msra.mxu0 %v157
    %182 = vmatprep.subr.mxu0 0.0
    %183 = vmatpush1.msra.mxu0 %v158
    %184 = vmatprep.subr.mxu0 0.0
    %185 = vmatpush1.msra.mxu0 %v159
    %186 = vmatprep.subr.mxu0 0.0
    %187 = vmatpush1.msra.mxu0 %v160
    %188 = vmatprep.subr.mxu0 0.0
    %189 = vmatpush1.msra.mxu0 %v161
    %190 = vmatprep.subr.mxu0 0.0
    %191 = vmatpush1.msra.mxu0 %v162
    %192 = vmatprep.subr.mxu0 0.0
    %193 = vmatpush1.msra.mxu0 %v163
    %194 = vmatprep.subr.mxu0 0.0
    %195 = vmatpush1.msra.mxu0 %v164
    %196 = vmatprep.subr.mxu0 0.0
    %197 = vmatpush1.msra.mxu0 %v165
    %198 = vmatprep.subr.mxu0 0.0
    %199 = vmatpush1.msra.mxu0 %v166
    %200 = vmatprep.subr.mxu0 0.0
    %201 = vmatpush1.msra.mxu0 %v167
    %202 = vmatprep.subr.mxu0 0.0
    %203 = vmatpush1.msra.mxu0 %v168
    %204 = vmatprep.subr.mxu0 0.0
    %205 = vmatpush1.msra.mxu0 %v169
    %206 = vmatprep.subr.mxu0 0.0
    %207 = vmatpush1.msra.mxu0 %v170
    %208 = vmatprep.subr.mxu0 0.0
    %209 = vmatpush1.msra.mxu0 %v171
    %210 = vmatprep.subr.mxu0 0.0
    %211 = vmatpush1.msra.mxu0 %v172
    %212 = vmatprep.subr.mxu0 0.0
    %213 = vmatpush1.msra.mxu0 0.0
    %214 = vmatprep.subr.mxu0 0.0
    %215 = vmatpush1.msra.mxu0 0.0
    %216 = vmatprep.subr.mxu0 0.0
    %217 = vmatpush1.msra.mxu0 0.0
    %218 = vmatprep.subr.mxu0 0.0
    %219 = vmatpush1.msra.mxu0 0.0
    %220 = vmatprep.subr.mxu0 0.0
    %221 = vmatpush1.msra.mxu0 0.0
    %222 = vmatprep.subr.mxu0 0.0
    %223 = vmatpush1.msra.mxu0 0.0
    %224 = vmatprep.subr.mxu0 0.0
    %225 = vmatpush1.msra.mxu0 0.0
    %226 = vmatprep.subr.mxu0 0.0
    %227 = vmatpush1.msra.mxu0 0.0
    %228 = vmatprep.subr.mxu0 0.0
    %229 = vmatpush1.msra.mxu0 0.0
    %230 = vmatprep.subr.mxu0 0.0
    %231 = vmatpush1.msra.mxu0 0.0
    %232 = vmatprep.subr.mxu0 0.0
    %233 = vmatpush1.msra.mxu0 0.0
    %234 = vmatprep.subr.mxu0 0.0
    %235 = vmatpush1.msra.mxu0 0.0
    %236 = vmatprep.subr.mxu0 0.0
    %237 = vmatpush1.msra.mxu0 0.0
    %238 = vmatprep.subr.mxu0 0.0
    %239 = vmatpush1.msra.mxu0 0.0
    %240 = vmatprep.subr.mxu0 0.0
    %241 = vmatpush1.msra.mxu0 0.0
    %242 = vmatprep.subr.mxu0 0.0
    %243 = vmatpush1.msra.mxu0 0.0
    %244 = vmatprep.mubr.f32.mxu0 0.0
    %245 = vmatmul.mubr.f32.gmra.mrb[0].mxu0 %v155
    %v246 = vpop.f32.mrb[0].mxu0
    %v247 = vadd.f32 %v178, %v246
    %v248 = vpop.f32.mrb[0].mxu0
    %249 = vmatprep.mubr.f32.mxu0 0.0
    %250 = vmatmul.mubr.f32.gmra.mrb[0].mxu0 %v156
    %v251 = vpop.f32.mrb[0].mxu0
    %v252 = vadd.f32 %v178, %v251
    %v253 = vpop.f32.mrb[0].mxu0
    %254 = vdwg.mxu0
    %v255 = vtanh.pop %v247
    %v256 = vtanh.pop %v252
    %257 = vst [vmem:[#allocation8] sm:$0xff] %v255
    %258 = vst [vmem:[#allocation8 + $0x8] sm:$0xff] %v256
    // Predicated region
    $region34: #{tpu_custom_call.1} parent=1 // pred_check
      _
    $region35: #{tpu_custom_call.1} parent=1 // pred_check_branch
      %260 = sbr.rel (0) target = $region37
    $region36: #{tpu_custom_call.1} parent=1 // pred_region
      %s262 = ssub.s32 256, 256
      %263 = vsyncadd [#allocation4], %s262
      %s264 = sshll.u32 [#allocation8], 4
      %s265 = int_to_ptr.vmem [resolvable:$true] %s264
      %270 = dma.vmem_to_hbm [thread:$0]  %s265, 256, %s5, [#allocation4], 128, 128, 8
    $region37: #{tpu_custom_call.1} parent=1 // pred_fallthru
      _
    // Predicated region
    $region38: #{tpu_custom_call.1} parent=1 // pred_check
      _
    $region39: #{tpu_custom_call.1} parent=1 // pred_check_branch
      %272 = sbr.rel (0) target = $region41
    $region40: #{tpu_custom_call.1} parent=1 // pred_region
      %273 = dma.done [#allocation4], 256
    $region41: #{tpu_custom_call.1} parent=1 // pred_fallthru
      _
    %274 = vsyncpa [#allocation3], 1
    %275 = vsyncpa [#allocation6], 1
    %276 = vsyncpa [#allocation4], 1

</llo_original>
